<compile_context>
chip_gen: v6e
topology: v6e:2x2x1
jax: 0.10.0
libtpu: 0.0.40
codegen_flags: <defaults>
</compile_context>

<pallas_src>
import functools

import jax
import jax.numpy as jnp
from jax.experimental import pallas as pl
from jax.experimental.pallas import tpu as pltpu


# ----------------------------- kernel ----------------------------------------

def rmsnorm_kernel(x_ref, w_ref, o_ref, *, eps):
    # x_ref: (TILE_R, D) in the input dtype; w_ref: (1, D); o_ref: (TILE_R, D).
    x = x_ref[...].astype(jnp.float32)                      # f32 math
    var = jnp.mean(x * x, axis=-1, keepdims=True)           # (TILE_R, 1)
    normed = (x * jax.lax.rsqrt(var + eps)).astype(x_ref.dtype)
    # torch: weight * hidden_states.to(input_dtype)  (broadcast over rows)
    o_ref[...] = (w_ref[...] * normed).astype(o_ref.dtype)


# ----------------------------- tiling helpers ---------------------------------

def _round_up(x, m):
    return ((x + m - 1) // m) * m


def _vmem_capacity_bytes():
    # Generation-aware VMEM capacity (64 MiB on v7x, 128 MiB on v5e/v6e).
    try:
        return int(pltpu.get_tpu_info().vmem_capacity_bytes)
    except Exception:
        return 128 << 20


def _pick_row_tile(n_rows, d, in_bytes, out_bytes, vmem_cap):
    """Largest multiple-of-8 row tile that fits the VMEM block budget,
    capped at 1024 rows, with >=2 grid steps whenever n_rows > 8 and
    balanced tile sizes (no tiny ragged tail)."""
    if n_rows <= 8:
        return n_rows  # single full-extent block (allowed even if not mult-of-8)

    # Double-buffered input + output blocks, plus headroom for the f32
    # intermediates the compiler may materialize (~2 f32 temps per row).
    block_budget = int(vmem_cap * 0.6)
    bytes_per_row = d * (2 * in_bytes + 2 * out_bytes + 8)
    tile_budget = max(8, (block_budget // bytes_per_row) // 8 * 8)

    # Plateau cap + guarantee at least 2 grid steps (feeds both TCs on v7x,
    # gives the DMA pipeline something to overlap).
    half = _round_up(pl.cdiv(n_rows, 2), 8)
    tile_r = max(8, min(1024, tile_budget, half))

    # Balance the tiles: tile_r ~= ceil(N / num_tiles), rounded up to 8.
    num_tiles = pl.cdiv(n_rows, tile_r)
    tile_r = max(8, _round_up(pl.cdiv(n_rows, num_tiles), 8))
    return tile_r


# ----------------------------- wrapper ----------------------------------------

def mllama_text_rmsnorm(hidden_states, weight, *, eps=1e-6, out_dtype=None):
    """RMSNorm over the last dim of `hidden_states` with learnable `weight`.

    out_dtype=None matches torch promotion (weight dtype x activation dtype).
    Pass out_dtype=hidden_states.dtype explicitly to halve write bandwidth
    for f32-weight / bf16-activation checkpoints if that is acceptable.
    """
    orig_shape = hidden_states.shape
    D = orig_shape[-1]
    x2 = hidden_states.reshape(-1, D)
    N = x2.shape[0]

    if out_dtype is None:
        out_dtype = jnp.promote_types(hidden_states.dtype, weight.dtype)
    w2 = weight.reshape(1, D)

    in_bytes = jnp.dtype(hidden_states.dtype).itemsize
    out_bytes = jnp.dtype(out_dtype).itemsize
    vmem_cap = _vmem_capacity_bytes()

    tile_r = _pick_row_tile(N, D, in_bytes, out_bytes, vmem_cap)
    grid = (pl.cdiv(N, tile_r),)

    # Raise the scoped VMEM limit (defaults: 16 MiB v5e / 32 MiB v6e, v7x) so
    # the larger double-buffered blocks are accepted; keep headroom below the
    # physical capacity.
    vmem_limit = max(32 << 20, min(int(vmem_cap * 0.7), 110 << 20))

    out = pl.pallas_call(
        functools.partial(rmsnorm_kernel, eps=eps),
        out_shape=jax.ShapeDtypeStruct((N, D), out_dtype),
        grid=grid,
        in_specs=[
            pl.BlockSpec((tile_r, D), lambda i: (i, 0)),   # activation rows
            pl.BlockSpec((1, D), lambda i: (0, 0)),        # weight (constant)
        ],
        out_specs=pl.BlockSpec((tile_r, D), lambda i: (i, 0)),
        compiler_params=pltpu.CompilerParams(
            dimension_semantics=("parallel",),             # shard across TCs
            vmem_limit_bytes=vmem_limit,
        ),
    )(x2, w2)

    return out.reshape(orig_shape[:-1] + (D,)).astype(out_dtype).reshape(orig_shape)


# ----------------------------- pure-JAX reference -----------------------------

def _reference(x, w, eps):
    xf = x.astype(jnp.float32)
    var = jnp.mean(xf * xf, axis=-1, keepdims=True)
    normed = (xf * jax.lax.rsqrt(var + eps)).astype(x.dtype)
    return w * normed


# ----------------------------- main --------------------------------------------

if __name__ == "__main__":
    key = jax.random.PRNGKey(0)
    k1, k2, k3, k4, k5, k6 = jax.random.split(key, 6)
    eps = 1e-6

    # Case 1: small f32 input -> 32 rows, exercises the >=2-grid-step path.
    B, S, D = 2, 16, 256
    x = jax.random.normal(k1, (B, S, D), jnp.float32)
    w = 1.0 + 0.1 * jax.random.normal(k2, (D,), jnp.float32)

    out = jax.block_until_ready(mllama_text_rmsnorm(x, w, eps=eps))
    ref = _reference(x, w, eps)
    assert out.shape == x.shape and out.dtype == x.dtype
    assert jnp.allclose(out, ref, atol=1e-5, rtol=1e-5), (
        f"f32 max abs err = {jnp.max(jnp.abs(out - ref))}"
    )

    # Case 2: bf16 input/weight, 640 rows -> balanced 320-row tiles (no ragged
    # tail), bf16 output (no accidental f32 promotion since weight is bf16).
    B2, S2, D2 = 4, 160, 512
    xb = jax.random.normal(k3, (B2, S2, D2), jnp.float32).astype(jnp.bfloat16)
    wb = (1.0 + 0.1 * jax.random.normal(k4, (D2,), jnp.float32)).astype(jnp.bfloat16)

    outb = jax.block_until_ready(mllama_text_rmsnorm(xb, wb, eps=eps))
    refb = _reference(xb, wb, eps)
    assert outb.shape == xb.shape and outb.dtype == jnp.bfloat16
    errb = jnp.max(jnp.abs(outb.astype(jnp.float32) - refb.astype(jnp.float32)))
    assert jnp.allclose(
        outb.astype(jnp.float32), refb.astype(jnp.float32), atol=2e-2, rtol=2e-2
    ), f"bf16 max abs err = {errb}"

    # Case 3: decode-shaped tiny batch (N <= 8 rows -> single full-extent block).
    B3, S3, D3 = 1, 4, 256
    xc = jax.random.normal(k5, (B3, S3, D3), jnp.float32)
    wc = 1.0 + 0.1 * jax.random.normal(k6, (D3,), jnp.float32)
    outc = jax.block_until_ready(mllama_text_rmsnorm(xc, wc, eps=eps))
    refc = _reference(xc, wc, eps)
    assert outc.shape == xc.shape
    assert jnp.allclose(outc, refc, atol=1e-5, rtol=1e-5), (
        f"tiny-N max abs err = {jnp.max(jnp.abs(outc - refc))}"
    )

    print("KERNEL_OK")
</pallas_src>

<mosaic_0001>
module attributes {stable_mosaic.version = 11 : i64} {
  func.func @rmsnorm_kernel(%arg0: i32, %arg1: memref<16x256xf32, #tpu.memory_space<vmem>>, %arg2: memref<1x256xf32, #tpu.memory_space<vmem>>, %arg3: memref<16x256xf32, #tpu.memory_space<vmem>>) attributes {dimension_semantics = [#tpu.dimension_semantics<parallel>], iteration_bounds = array<i64: 2>, scalar_prefetch = 0 : i64, scratch_operands = 0 : i64, tpu.core_type = #tpu.core_type<tc>, window_params = [{transform_indices = @transform_0, window_bounds = array<i64: 16, 256>}, {pipeline_mode = #tpu.pipeline_mode<synchronous>, transform_indices = @transform_1, window_bounds = array<i64: 1, 256>}, {transform_indices = @transform_2, window_bounds = array<i64: 16, 256>}]} {
    %c0 = arith.constant 0 : index
    %c0_0 = arith.constant 0 : index
    %0 = vector.load %arg1[%c0, %c0_0] : memref<16x256xf32, #tpu.memory_space<vmem>>, vector<16x256xf32>
    %1 = arith.mulf %0, %0 : vector<16x256xf32>
    %cst = arith.constant dense<0.000000e+00> : vector<16xf32>
    %2 = vector.multi_reduction <add>, %1, %cst [1] : vector<16x256xf32> to vector<16xf32>
    %3 = vector.shape_cast %2 : vector<16xf32> to vector<16x1xf32>
    %cst_1 = arith.constant 2.560000e+02 : f32
    %4 = vector.broadcast %cst_1 : f32 to vector<16x1xf32>
    %5 = arith.divf %3, %4 : vector<16x1xf32>
    %cst_2 = arith.constant 9.99999997E-7 : f32
    %6 = vector.broadcast %cst_2 : f32 to vector<16x1xf32>
    %7 = arith.addf %5, %6 : vector<16x1xf32>
    %8 = math.rsqrt %7 : vector<16x1xf32>
    %9 = vector.broadcast %8 : vector<16x1xf32> to vector<16x256xf32>
    %10 = arith.mulf %0, %9 : vector<16x256xf32>
    %c0_3 = arith.constant 0 : index
    %c0_4 = arith.constant 0 : index
    %11 = vector.load %arg2[%c0_3, %c0_4] : memref<1x256xf32, #tpu.memory_space<vmem>>, vector<1x256xf32>
    %12 = vector.broadcast %11 : vector<1x256xf32> to vector<16x256xf32>
    %13 = arith.mulf %12, %10 : vector<16x256xf32>
    %c0_5 = arith.constant 0 : index
    %c0_6 = arith.constant 0 : index
    %14 = vector.load %arg3[%c0_5, %c0_6] : memref<16x256xf32, #tpu.memory_space<vmem>>, vector<16x256xf32>
    tpu.vector_store %arg3[%c0_5, %c0_6], %13 {strides = array<i32>} : memref<16x256xf32, #tpu.memory_space<vmem>>, vector<16x256xf32>,
    return
  }
  func.func @transform_0(%arg0: i32) -> (i32, i32) {
    %c0_i32 = arith.constant 0 : i32
    %c0_i32_0 = arith.constant 0 : i32
    return %arg0, %c0_i32 : i32, i32
  }
  func.func @transform_1(%arg0: i32) -> (i32, i32) {
    %c0_i32 = arith.constant 0 : i32
    %c0_i32_0 = arith.constant 0 : i32
    %c0_i32_1 = arith.constant 0 : i32
    return %c0_i32, %c0_i32_0 : i32, i32
  }
  func.func @transform_2(%arg0: i32) -> (i32, i32) {
    %c0_i32 = arith.constant 0 : i32
    %c0_i32_0 = arith.constant 0 : i32
    return %arg0, %c0_i32 : i32, i32
  }
}

</mosaic_0001>

<llo_original>
// kernel: tpu_custom_call.1
$region0: #{tpu_custom_call.1}
  #allocation0 [shape = 'u32[]', space=smem, size = 0x4, offset = 0x4, fixed_abs, tag = 'smem constant byte address 0x4 - core index']
  #allocation1 [shape = 'u32[144,128]{1,0:T(1,128)}', space=vmem, size = 0x12000, scoped, tag = 'internal scratch']
  %s0 = inlined_call_operand.hbm [shape: f32[32,256], index: 0, kind: input, shape index: {}]
  %s1 = inlined_call_operand.hbm [shape: f32[1,256], index: 1, kind: input, shape index: {}]
  %s2 = inlined_call_operand.hbm [shape: f32[32,256], index: 2, kind: output, shape index: {}]
  %s3 = sld [smem:[#allocation0]]
  $region49: #{tpu_custom_call.1} parent=0
    _
  %s5 = ssub.s32 1, %s3
  %s6 = scalar_select 0, %s5, %s3
  $region1: #{tpu_custom_call.1} parent=0
    #allocation2 [shape = 'u8[32768]{0}', space=vmem, size = 0x8000, scoped, tag = 'input window, operand 0']
    #allocation3 [shape = 's32[2]{0}', space=sflag, size = 0x8, scoped, tag = 'scoped memory for tpu_custom_call.1']
    #allocation4 [shape = 's32[2]{0}', space=sflag, size = 0x8, scoped, tag = 'scoped memory for tpu_custom_call.1']
    #allocation5 [shape = 'u8[1024]{0}', space=vmem, size = 0x400, scoped, tag = 'input window, operand 1, single buffered']
    #allocation6 [shape = 's32[1]{0}', space=sflag, size = 0x4, scoped, tag = 'scoped memory for tpu_custom_call.1']
    #allocation7 [shape = 'u8[32768]{0}', space=vmem, size = 0x8000, scoped, tag = 'output window, operand 0']
    %7 = vsyncpa [#allocation3], 0
    %s8 = scalar_lea.sflag [#allocation3], 1
    %9 = vsyncpa %s8, 0
    %10 = vsyncpa [#allocation6], 0
    %11 = vsyncpa [#allocation4], 0
    %s12 = scalar_lea.sflag [#allocation4], 1
    %13 = vsyncpa %s12, 0
    loop: start=0, step=1, limit=4
    $region2: #{tpu_custom_call.1} parent=1 // loop_pre_header
      _
    $region3: #{tpu_custom_call.1} parent=1 // loop_header
      %s15 = sphi 0, %s19
      %p16 = scmp.ge.s32.totalorder %s15, 4
      %s25 = sphi 0, %s27
      %s28 = sphi 0, %s25
      %s29 = sphi 0, %s28
      %s45 = sphi 0, %s29
      %s49 = sphi 0, %s49
      %s51 = sphi 0, %s49
      %s52 = sphi 0, %s51
      %s66 = sphi 0, %s52
      %s72 = sphi 0, %s74
      %s75 = sphi 0, %s72
      %s76 = sphi 0, %s75
      %s92 = sphi 0, %s76
    $region4: #{tpu_custom_call.1} parent=1 // loop_header_branch
      %18 = sbr.rel (%p16) target = $region8
    $region5: #{tpu_custom_call.1} parent=1 // loop_body
      %s20 = ssub.s32 %s15, 1
      %s21 = ssub.s32 %s15, 2
      %s22 = sadd.s32 %s15, 1
      %s23 = ssub.s32 %s15, %s22
      %p24 = scmp.eq.s32.totalorder %s23, 0
      %s26 = sadd.s32 %s25, 1
      %s27 = scalar_select %p24, %s25, %s26
      %p30 = pneg %p24
      %p31 = scmp.eq.s32.totalorder %s15, 1
      %p32 = por %p30, %p31
      %p33 = scmp.ne.s32.totalorder %s25, %s28
      %p34 = scmp.eq.s32.totalorder %s15, 0
      %p35 = por %p33, %p34
      %p36 = scmp.ne.s32.totalorder %s25, %s28
      %p37 = scmp.eq.s32.totalorder %s20, 1
      %p38 = por %p36, %p37
      %p39 = scmp.ne.s32.totalorder %s28, %s29
      %p40 = scmp.eq.s32.totalorder %s20, 0
      %p41 = por %p39, %p40
      %p42 = scmp.ne.s32.totalorder %s28, %s29
      %p43 = scmp.eq.s32.totalorder %s21, 1
      %p44 = por %p42, %p43
      %p46 = scmp.ne.s32.totalorder %s29, %s45
      %p47 = scmp.eq.s32.totalorder %s21, 0
      %p48 = por %p46, %p47
      %s50 = sadd.s32 %s49, 1
      %p53 = scmp.eq.s32.totalorder %s15, 1
      %p54 = scmp.ne.s32.totalorder %s49, %s51
      %p55 = scmp.eq.s32.totalorder %s15, 0
      %p56 = por %p54, %p55
      %p57 = scmp.ne.s32.totalorder %s49, %s51
      %p58 = scmp.eq.s32.totalorder %s20, 1
      %p59 = por %p57, %p58
      %p60 = scmp.ne.s32.totalorder %s51, %s52
      %p61 = scmp.eq.s32.totalorder %s20, 0
      %p62 = por %p60, %p61
      %p63 = scmp.ne.s32.totalorder %s51, %s52
      %p64 = scmp.eq.s32.totalorder %s21, 1
      %p65 = por %p63, %p64
      %p67 = scmp.ne.s32.totalorder %s52, %s66
      %p68 = scmp.eq.s32.totalorder %s21, 0
      %p69 = por %p67, %p68
      %s70 = ssub.s32 %s15, %s22
      %p71 = scmp.eq.s32.totalorder %s70, 0
      %s73 = sadd.s32 %s72, 1
      %s74 = scalar_select %p71, %s72, %s73
      %p77 = pneg %p71
      %p78 = scmp.eq.s32.totalorder %s15, 1
      %p79 = por %p77, %p78
      %p80 = scmp.ne.s32.totalorder %s72, %s75
      %p81 = scmp.eq.s32.totalorder %s15, 0
      %p82 = por %p80, %p81
      %p83 = scmp.ne.s32.totalorder %s72, %s75
      %p84 = scmp.eq.s32.totalorder %s20, 1
      %p85 = por %p83, %p84
      %p86 = scmp.ne.s32.totalorder %s75, %s76
      %p87 = scmp.eq.s32.totalorder %s20, 0
      %p88 = por %p86, %p87
      %p89 = scmp.ne.s32.totalorder %s75, %s76
      %p90 = scmp.eq.s32.totalorder %s21, 1
      %p91 = por %p89, %p90
      %p93 = scmp.ne.s32.totalorder %s76, %s92
      %p94 = scmp.eq.s32.totalorder %s21, 0
      %p95 = por %p93, %p94
      %p96 = scmp.le.s32.totalorder 1, %s15
      %p97 = scmp.lt.s32.totalorder %s15, 3
      %p98 = pnand %p96, %p97
      %p99 = pneg %p98
      // Predicated region
      $region9: #{tpu_custom_call.1} parent=5 // pred_check
        _
      $region10: #{tpu_custom_call.1} parent=5 // pred_check_branch
        %101 = sbr.rel (%p98) target = $region12
      $region11: #{tpu_custom_call.1} parent=5 // pred_region
        %s102 = ssub.s32 %s15, 1
        // Predicated region
        $region13: #{tpu_custom_call.1} parent=11 // pred_check
          %p103 = pneg %p62
        $region14: #{tpu_custom_call.1} parent=11 // pred_check_branch
          %105 = sbr.rel (%p103) target = $region16
        $region15: #{tpu_custom_call.1} parent=11 // pred_region
          %s107 = ssub.s32 32, 32
          %108 = vsyncadd [#allocation6], %s107
          %s110 = sshll.u32 [#allocation5], 4
          %s111 = int_to_ptr.vmem [resolvable:$true] %s110
          %113 = dma.hbm_to_vmem [thread:$0]  %s1, 32, %s111, [#allocation6]
        $region16: #{tpu_custom_call.1} parent=11 // pred_fallthru
          _
      $region12: #{tpu_custom_call.1} parent=5 // pred_fallthru
        _
      %p114 = scmp.lt.s32.totalorder %s15, 2
      // Predicated region
      $region17: #{tpu_custom_call.1} parent=5 // pred_check
        %p115 = pneg %p114
      $region18: #{tpu_custom_call.1} parent=5 // pred_check_branch
        %117 = sbr.rel (%p115) target = $region20
      $region19: #{tpu_custom_call.1} parent=5 // pred_region
        // Predicated region
        $region21: #{tpu_custom_call.1} parent=19 // pred_check
          %p118 = pneg %p35
        $region22: #{tpu_custom_call.1} parent=19 // pred_check_branch
          %120 = sbr.rel (%p118) target = $region24
        $region23: #{tpu_custom_call.1} parent=19 // pred_region
          %s121 = sand.u32 %s25, 1
          %s122 = scalar_lea.sflag [#allocation3], %s121
          %s123 = sand.u32 %s25, 1
          %s124 = smul.addr %s123, 32
          %s125 = scalar_lea.vmem [#allocation2], %s124
          %s126 = smul.u32 2, %s15
          %s128 = ssub.s32 512, 512
          %129 = vsyncadd %s122, %s128
          %s130 = smul.addr %s126, 2
          %s131 = smul.addr %s130, 128
          %s132 = scalar_lea.hbm %s0, %s131
          %s133 = sshll.u32 %s125, 4
          %s134 = int_to_ptr.vmem [resolvable:$true] %s133
          %139 = dma.hbm_to_vmem [thread:$0]  %s132, 512, %s134, %s122, 256, 256, 16
        $region24: #{tpu_custom_call.1} parent=19 // pred_fallthru
          _
      $region20: #{tpu_custom_call.1} parent=5 // pred_fallthru
        _
      %p140 = scmp.le.s32.totalorder 1, %s15
      %p141 = scmp.lt.s32.totalorder %s15, 3
      %p142 = pnand %p140, %p141
      %p143 = pneg %p142
      // Predicated region
      $region25: #{tpu_custom_call.1} parent=5 // pred_check
        _
      $region26: #{tpu_custom_call.1} parent=5 // pred_check_branch
        %145 = sbr.rel (%p142) target = $region28
      $region27: #{tpu_custom_call.1} parent=5 // pred_region
        %s146 = ssub.s32 %s15, 1
        %s147 = sand.u32 %s28, 1
        %s148 = scalar_lea.sflag [#allocation3], %s147
        %s149 = sand.u32 %s28, 1
        %s150 = smul.addr %s149, 32
        %s151 = scalar_lea.vmem [#allocation2], %s150
        // Predicated region
        $region29: #{tpu_custom_call.1} parent=27 // pred_check
          %p152 = pneg %p41
        $region30: #{tpu_custom_call.1} parent=27 // pred_check_branch
          %154 = sbr.rel (%p152) target = $region32
        $region31: #{tpu_custom_call.1} parent=27 // pred_region
          %155 = dma.done %s148, 512
        $region32: #{tpu_custom_call.1} parent=27 // pred_fallthru
          _
        // Predicated region
        $region33: #{tpu_custom_call.1} parent=27 // pred_check
          %p156 = pneg %p62
        $region34: #{tpu_custom_call.1} parent=27 // pred_check_branch
          %158 = sbr.rel (%p156) target = $region36
        $region35: #{tpu_custom_call.1} parent=27 // pred_region
          %159 = dma.done [#allocation6], 32
        $region36: #{tpu_custom_call.1} parent=27 // pred_fallthru
          _
        %s160 = sand.u32 %s28, 1
        %s161 = scalar_lea.sflag [#allocation3], %s160
        %s162 = sand.u32 %s28, 1
        %s163 = smul.addr %s162, 32
        %s164 = scalar_lea.vmem [#allocation2], %s163
        %p165 = pneg %p41
        %p166 = pneg %p38
        %p167 = pneg %p62
        %p168 = pneg %p59
        %p169 = pneg %p88
        %p170 = pneg %p85
        %s171 = sand.u32 %s75, 1
        %s172 = scalar_lea.sflag [#allocation4], %s171
        %s173 = sand.u32 %s75, 1
        %s174 = smul.addr %s173, 32
        %s175 = scalar_lea.vmem [#allocation7], %s174
        %s176 = smul.u32 2, %s20
        %s177 = smul.u32 2, %s20
        %v178 = vld [vmem:[%s151] sm:$0xff]
        %v179 = vld [vmem:[%s151 + $0x8] sm:$0xff]
        %v180 = vld [vmem:[%s151 + $0x10] sm:$0xff]
        %v181 = vld [vmem:[%s151 + $0x18] sm:$0xff]
        %v182 = vmul.f32 %v178, %v178
        %v183 = vmul.f32 %v179, %v179
        %v184 = vmul.f32 %v180, %v180
        %v185 = vmul.f32 %v181, %v181
        %v186 = vadd.f32 %v182, %v183
        %187 = vadd.xlane.f32.xlu0 %v186
        %v188 = vpop.xlane.xlu0 %187
        %v189 = vadd.f32 %v184, %v185
        %190 = vadd.xlane.f32.xlu0 %v189
        %v191 = vpop.xlane.xlu0 %190
        %v192 = vrcp.pop 256.0
        %v193 = vmul.f32 %v188, %v192
        %v194 = vmul.f32 %v191, %v192
        %v195 = vadd.f32 %v193, 1e-06
        %v196 = vadd.f32 %v194, 1e-06
        %v197 = vrsqrt.pop %v195
        %v198 = vrsqrt.pop %v196
        %v199 = vmul.f32 %v178, %v197
        %v200 = vmul.f32 %v179, %v197
        %v201 = vmul.f32 %v180, %v198
        %v202 = vmul.f32 %v181, %v198
        %v203 = vld [vmem:[#allocation5] sm:$0x3]
        %v205 = vlaneseq
        %v206 = vshrl.u32 %v205, 7
        %v207 = vsub.s32 0, %v206
        %v208 = vrot.slane %v203, %v207
        %v209 = vlaneseq
        %v210 = vshrl.u32 %v209, 7
        %v211 = vsub.s32 1, %v210
        %v212 = vrot.slane %v203, %v211
        %v215 = vmul.f32 %v208, %v199
        %v216 = vmul.f32 %v212, %v200
        %v217 = vmul.f32 %v208, %v201
        %v218 = vmul.f32 %v212, %v202
        %219 = vst [vmem:[%s175] sm:$0xff] %v215
        %220 = vst [vmem:[%s175 + $0x8] sm:$0xff] %v216
        %221 = vst [vmem:[%s175 + $0x10] sm:$0xff] %v217
        %222 = vst [vmem:[%s175 + $0x18] sm:$0xff] %v218
        %s223 = sand.u32 %s75, 1
        %s224 = scalar_lea.sflag [#allocation4], %s223
        %s225 = sand.u32 %s75, 1
        %s226 = smul.addr %s225, 32
        %s227 = scalar_lea.vmem [#allocation7], %s226
        // Predicated region
        $region37: #{tpu_custom_call.1} parent=27 // pred_check
          %p228 = pneg %p85
        $region38: #{tpu_custom_call.1} parent=27 // pred_check_branch
          %230 = sbr.rel (%p228) target = $region40
        $region39: #{tpu_custom_call.1} parent=27 // pred_region
          %s231 = smul.u32 2, %s20
          %s233 = ssub.s32 512, 512
          %234 = vsyncadd %s224, %s233
          %s235 = smul.addr %s231, 2
          %s236 = smul.addr %s235, 128
          %s237 = scalar_lea.hbm %s2, %s236
          %s238 = sshll.u32 %s227, 4
          %s239 = int_to_ptr.vmem [resolvable:$true] %s238
          %244 = dma.vmem_to_hbm [thread:$0]  %s239, 512, %s237, %s224, 256, 256, 16
        $region40: #{tpu_custom_call.1} parent=27 // pred_fallthru
          _
      $region28: #{tpu_custom_call.1} parent=5 // pred_fallthru
        _
      %p245 = scmp.le.s32.totalorder 2, %s15
      // Predicated region
      $region41: #{tpu_custom_call.1} parent=5 // pred_check
        %p246 = pneg %p245
      $region42: #{tpu_custom_call.1} parent=5 // pred_check_branch
        %248 = sbr.rel (%p246) target = $region44
      $region43: #{tpu_custom_call.1} parent=5 // pred_region
        %s249 = ssub.s32 %s15, 2
        // Predicated region
        $region45: #{tpu_custom_call.1} parent=43 // pred_check
          %p250 = pneg %p91
        $region46: #{tpu_custom_call.1} parent=43 // pred_check_branch
          %252 = sbr.rel (%p250) target = $region48
        $region47: #{tpu_custom_call.1} parent=43 // pred_region
          %s253 = sand.u32 %s76, 1
          %s254 = scalar_lea.sflag [#allocation4], %s253
          %s255 = sand.u32 %s76, 1
          %s256 = smul.addr %s255, 32
          %s257 = scalar_lea.vmem [#allocation7], %s256
          %258 = dma.done %s254, 512
        $region48: #{tpu_custom_call.1} parent=43 // pred_fallthru
          _
      $region44: #{tpu_custom_call.1} parent=5 // pred_fallthru
        _
    $region6: #{tpu_custom_call.1} parent=1 // loop_footer
      %s19 = sadd.s32 1, %s15
    $region7: #{tpu_custom_call.1} parent=1 // loop_footer_branch
      %14 = sbr.rel target = $region3
    $region8: #{tpu_custom_call.1} parent=1 // loop_exit
      _
    %259 = vsyncpa [#allocation3], 1
    %s260 = scalar_lea.sflag [#allocation3], 1
    %261 = vsyncpa %s260, 1
    %262 = vsyncpa [#allocation6], 1
    %263 = vsyncpa [#allocation4], 1
    %s264 = scalar_lea.sflag [#allocation4], 1
    %265 = vsyncpa %s264, 1

</llo_original>
